<compile_context>
chip_gen: v7x
topology: tpu7x:2x2x1
jax: 0.10.0
libtpu: 0.0.40
codegen_flags: <defaults>
</compile_context>

<pallas_src>
import functools

import jax
import jax.numpy as jnp
from jax import lax
from jax.experimental import pallas as pl
from jax.experimental.pallas import tpu as pltpu


def _round_up(x, m):
    return (x + m - 1) // m * m


def _cdiv(a, b):
    return (a + b - 1) // b


def _entropy_ref(x):
    xf = x.astype(jnp.float32)
    p = jax.nn.softmax(xf, axis=1)
    logp = jax.nn.log_softmax(xf, axis=1)
    return -(p * logp).mean()


def _entropy_kernel(x_ref, o_ref, *, s, ts, tpg, mask_needed):
    # x_ref block: (Bn, C, TS)    -- channels on sublanes, spatial tile on lanes.
    # o_ref block: (1, Bn, 1, TS) -- f32 per-row/per-lane accumulator, resident
    #                                across the spatial-tile ("arbitrary") axis.
    t = pl.program_id(2)

    @pl.when(t == 0)
    def _():
        o_ref[...] = jnp.zeros_like(o_ref)

    x = x_ref[...].astype(jnp.float32)              # (Bn, C, TS)
    m = jnp.max(x, axis=1, keepdims=True)           # (Bn, 1, TS)
    sh = x - m                                      # (Bn, C, TS)
    e = jnp.exp(sh)                                 # single exp per element
    z = jnp.sum(e, axis=1, keepdims=True)           # (Bn, 1, TS), z >= 1
    num = jnp.sum(e * sh, axis=1, keepdims=True)    # (Bn, 1, TS)
    # sum_C p * logp  ==  num/z - log(z)
    contrib = num / z - jnp.log(z)                  # (Bn, 1, TS)

    if mask_needed:  # static: only traced when the last tile is partial
        g = pl.program_id(0)
        tile = g * tpg + t
        lane = lax.broadcasted_iota(jnp.int32, (1, 1, ts), 2)
        contrib = jnp.where(tile * ts + lane < s, contrib, 0.0)

    o_ref[...] = o_ref[...] + contrib[None]


def entropy_loss(x, *, target_block_bytes=8 * 2**20, min_pallas_bytes=1 << 20,
                 force_pallas=False):
    """x: (N, C, ...) array (softmax over dim 1). Returns scalar entropy (f32)."""
    shape = x.shape
    N, C = int(shape[0]), int(shape[1])
    S = 1
    for d in shape[2:]:
        S *= int(d)
    numel = N * C * S

    itemsize = jnp.dtype(x.dtype).itemsize
    if (not force_pallas) and numel * itemsize < min_pallas_bytes:
        # Tiny tensors: XLA's fused softmax/reduce beats the pallas_call launch.
        return _entropy_ref(x)

    xr = x.reshape(N, C, S)

    # ---- generation-aware VMEM budget --------------------------------------
    try:
        vmem_cap = int(pltpu.get_tpu_info().vmem_capacity_bytes)
    except Exception:
        vmem_cap = 0
    if vmem_cap <= 0:
        vmem_cap = 64 * 2**20                    # conservative default (v7x)
    budget = (vmem_cap * 3) // 4                 # 48 MiB on v7x, 96 MiB on v5e/v6e

    # ---- block sizing -------------------------------------------------------
    sub = max(8, 32 // itemsize)                 # sublane multiple for input dtype
    c_pad = _round_up(C, sub)                    # real sublane footprint of C
    per_lane_in = c_pad * itemsize               # VMEM bytes per lane per row (input)
    per_lane_out = 8 * 4                         # (.,1,TS) f32 acc pads to 8 sublanes

    s128 = _round_up(S, 128)
    ts_by_target = target_block_bytes // per_lane_in
    ts_by_budget = budget // (2 * (per_lane_in + per_lane_out))   # 2x = double buffer
    TS = min(s128, max(128, (min(ts_by_target, ts_by_budget) // 128) * 128))
    T = _cdiv(S, TS)
    mask_needed = (S % TS) != 0

    # Fold batch rows into the block when a single spatial tile already covers S
    # but the block is still far below the per-step target (small C and/or S).
    Bn = 1
    if TS >= s128 and N > 1:
        per_row_in = per_lane_in * TS
        per_row_tot = 2 * (per_lane_in + per_lane_out) * TS
        cap = min(N, max(1, target_block_bytes // per_row_in),
                  max(1, budget // per_row_tot))
        Bn = max(d for d in range(1, cap + 1) if N % d == 0)
    NB = N // Bn

    # If the batch-block axis collapses, split the spatial tiles into two parallel
    # groups so both v7x TensorCores get work (no fully-OOB tiles: only when T even).
    G = 2 if (NB == 1 and T >= 2 and T % 2 == 0) else 1
    TPG = T // G

    kernel = functools.partial(_entropy_kernel, s=S, ts=TS, tpg=TPG,
                               mask_needed=mask_needed)

    partials = pl.pallas_call(
        kernel,
        out_shape=jax.ShapeDtypeStruct((G, N, 1, TS), jnp.float32),
        grid_spec=pltpu.PrefetchScalarGridSpec(
            num_scalar_prefetch=0,
            grid=(G, NB, TPG),
            in_specs=[pl.BlockSpec((Bn, C, TS),
                                   lambda g, nb, t: (nb, 0, g * TPG + t))],
            # Same block across the spatial-tile axis -> resident accumulator;
            # distinct blocks per (group, batch-block) -> parallel axes.
            out_specs=pl.BlockSpec((1, Bn, 1, TS),
                                   lambda g, nb, t: (g, nb, 0, 0)),
        ),
        compiler_params=pltpu.CompilerParams(
            dimension_semantics=("parallel", "parallel", "arbitrary"),
            vmem_limit_bytes=int(budget),
        ),
    )(xr)

    total = jnp.sum(partials, dtype=jnp.float32)
    return -(total / jnp.float32(numel))


if __name__ == "__main__":
    key = jax.random.PRNGKey(0)
    k1, k2, k3 = jax.random.split(key, 3)

    def check(x, **kw):
        out = jax.block_until_ready(entropy_loss(x, force_pallas=True, **kw))
        ref = jax.block_until_ready(_entropy_ref(x))
        assert jnp.allclose(out, ref, atol=1e-5, rtol=1e-5), (out, ref)

    # Primary shape from the module spec: NCHW, batch=2, channels=4, 16x16.
    check(jax.random.normal(k1, (2, 4, 16, 16), dtype=jnp.float32))
    # Multi-tile spatial axis + G=2 parallel spatial split (N=1, T=8).
    check(jax.random.normal(k2, (1, 4, 16, 64), dtype=jnp.float32),
          target_block_bytes=4096)
    # Ragged spatial extent (lane mask on the last tile) + C not a multiple of 8.
    check(jax.random.normal(k3, (2, 6, 10, 30), dtype=jnp.float32),
          target_block_bytes=4096)

    print("KERNEL_OK")
</pallas_src>

<mosaic_0001>
module attributes {stable_mosaic.version = 11 : i64} {
  func.func @_entropy_kernel(%arg0: i32, %arg1: i32, %arg2: i32, %arg3: memref<2x4x256xf32, #tpu.memory_space<vmem>>, %arg4: memref<1x2x1x256xf32, #tpu.memory_space<vmem>>) attributes {dimension_semantics = [#tpu.dimension_semantics<parallel>, #tpu.dimension_semantics<parallel>, #tpu.dimension_semantics<arbitrary>], iteration_bounds = array<i64: 1, 1, 1>, scalar_prefetch = 0 : i64, scratch_operands = 0 : i64, tpu.core_type = #tpu.core_type<tc>, window_params = [{transform_indices = @transform_0, window_bounds = array<i64: 2, 4, 256>}, {transform_indices = @transform_1, window_bounds = array<i64: 1, 2, 1, 256>}]} {
    %c0_i32 = arith.constant 0 : i32
    %0 = arith.cmpi eq, %arg2, %c0_i32 : i32
    %1 = arith.extui %0 : i1 to i32
    %c0_i32_0 = arith.constant 0 : i32
    %2 = arith.cmpi ne, %1, %c0_i32_0 : i32
    scf.if %2 {
      %cst_13 = arith.constant 0.000000e+00 : f32
      %21 = vector.broadcast %cst_13 : f32 to vector<1x2x1x256xf32>
      %c0_14 = arith.constant 0 : index
      %c0_15 = arith.constant 0 : index
      %c0_16 = arith.constant 0 : index
      %c0_17 = arith.constant 0 : index
      %22 = vector.load %arg4[%c0_14, %c0_15, %c0_16, %c0_17] : memref<1x2x1x256xf32, #tpu.memory_space<vmem>>, vector<1x2x1x256xf32>
      tpu.vector_store %arg4[%c0_14, %c0_15, %c0_16, %c0_17], %21 {strides = array<i32>} : memref<1x2x1x256xf32, #tpu.memory_space<vmem>>, vector<1x2x1x256xf32>,
    } else {
    }
    %c0 = arith.constant 0 : index
    %c0_1 = arith.constant 0 : index
    %c0_2 = arith.constant 0 : index
    %3 = vector.load %arg3[%c0, %c0_1, %c0_2] : memref<2x4x256xf32, #tpu.memory_space<vmem>>, vector<2x4x256xf32>
    %cst = arith.constant dense<0xFF800000> : vector<2x256xf32>
    %4 = vector.multi_reduction <maximumf>, %3, %cst [1] : vector<2x4x256xf32> to vector<2x256xf32>
    %5 = vector.shape_cast %4 : vector<2x256xf32> to vector<2x1x256xf32>
    %6 = vector.broadcast %5 : vector<2x1x256xf32> to vector<2x4x256xf32>
    %7 = arith.subf %3, %6 : vector<2x4x256xf32>
    %8 = math.exp %7 : vector<2x4x256xf32>
    %cst_3 = arith.constant dense<0.000000e+00> : vector<2x256xf32>
    %9 = vector.multi_reduction <add>, %8, %cst_3 [1] : vector<2x4x256xf32> to vector<2x256xf32>
    %10 = vector.shape_cast %9 : vector<2x256xf32> to vector<2x1x256xf32>
    %11 = arith.mulf %8, %7 : vector<2x4x256xf32>
    %cst_4 = arith.constant dense<0.000000e+00> : vector<2x256xf32>
    %12 = vector.multi_reduction <add>, %11, %cst_4 [1] : vector<2x4x256xf32> to vector<2x256xf32>
    %13 = vector.shape_cast %12 : vector<2x256xf32> to vector<2x1x256xf32>
    %14 = arith.divf %13, %10 : vector<2x1x256xf32>
    %15 = math.log %10 : vector<2x1x256xf32>
    %16 = arith.subf %14, %15 : vector<2x1x256xf32>
    %c0_5 = arith.constant 0 : index
    %c0_6 = arith.constant 0 : index
    %c0_7 = arith.constant 0 : index
    %c0_8 = arith.constant 0 : index
    %17 = vector.load %arg4[%c0_5, %c0_6, %c0_7, %c0_8] : memref<1x2x1x256xf32, #tpu.memory_space<vmem>>, vector<1x2x1x256xf32>
    %18 = vector.shape_cast %16 : vector<2x1x256xf32> to vector<1x2x1x256xf32>
    %19 = arith.addf %17, %18 : vector<1x2x1x256xf32>
    %c0_9 = arith.constant 0 : index
    %c0_10 = arith.constant 0 : index
    %c0_11 = arith.constant 0 : index
    %c0_12 = arith.constant 0 : index
    %20 = vector.load %arg4[%c0_9, %c0_10, %c0_11, %c0_12] : memref<1x2x1x256xf32, #tpu.memory_space<vmem>>, vector<1x2x1x256xf32>
    tpu.vector_store %arg4[%c0_9, %c0_10, %c0_11, %c0_12], %19 {strides = array<i32>} : memref<1x2x1x256xf32, #tpu.memory_space<vmem>>, vector<1x2x1x256xf32>,
    return
  }
  func.func @transform_0(%arg0: i32, %arg1: i32, %arg2: i32) -> (i32, i32, i32) {
    %c1_i32 = arith.constant 1 : i32
    %0 = arith.muli %arg0, %c1_i32 : i32
    %1 = arith.addi %0, %arg2 : i32
    %c0_i32 = arith.constant 0 : i32
    %c0_i32_0 = arith.constant 0 : i32
    return %arg1, %c0_i32, %1 : i32, i32, i32
  }
  func.func @transform_1(%arg0: i32, %arg1: i32, %arg2: i32) -> (i32, i32, i32, i32) {
    %c0_i32 = arith.constant 0 : i32
    %c0_i32_0 = arith.constant 0 : i32
    %c0_i32_1 = arith.constant 0 : i32
    return %arg0, %arg1, %c0_i32, %c0_i32_0 : i32, i32, i32, i32
  }
}

</mosaic_0001>

<llo_original>
// kernel: tpu_custom_call.1
$region0: #{tpu_custom_call.1}
  #allocation0 [shape = 'u32[]', space=smem, size = 0x4, offset = 0x4, fixed_abs, tag = 'smem constant byte address 0x4 - core index']
  #allocation1 [shape = 'u32[144,128]{1,0:T(1,128)}', space=vmem, size = 0x12000, scoped, tag = 'internal scratch']
  %s0 = inlined_call_operand.hbm [shape: f32[2,4,256], index: 0, kind: input, shape index: {}]
  %s1 = inlined_call_operand.hbm [shape: f32[1,2,1,256], index: 1, kind: output, shape index: {}]
  %s2 = sld [smem:[#allocation0]]
  $region22: #{tpu_custom_call.1} parent=0
    _
  %s4 = ssub.s32 1, %s2
  %s5 = scalar_select 0, %s4, %s2
  $region1: #{tpu_custom_call.1} parent=0
    #allocation2 [shape = 'u8[8192]{0}', space=vmem, size = 0x2000, scoped, tag = 'input window, operand 0, single buffered']
    #allocation3 [shape = 's32[1]{0}', space=sflag, size = 0x4, scoped, tag = 'scoped memory for tpu_custom_call.1']
    #allocation4 [shape = 's32[1]{0}', space=sflag, size = 0x4, scoped, tag = 'scoped memory for tpu_custom_call.1']
    #allocation5 [shape = 'u8[2048]{0}', space=vmem, size = 0x800, scoped, tag = 'output window, operand 0, single buffered']
    %6 = vsyncpa [#allocation3], 0
    %7 = vsyncpa [#allocation4], 0
    // Predicated region
    $region2: #{tpu_custom_call.1} parent=1 // pred_check
      _
    $region3: #{tpu_custom_call.1} parent=1 // pred_check_branch
      %9 = sbr.rel (0) target = $region5
    $region4: #{tpu_custom_call.1} parent=1 // pred_region
      %s10 = sadd.s32 0, 0
      %s11 = smul.u32 2, %s10
      %s13 = ssub.s32 256, 256
      %14 = vsyncadd [#allocation3], %s13
      %s15 = smul.addr %s11, 64
      %s16 = scalar_lea.hbm %s0, %s15
      %s17 = sshll.u32 [#allocation2], 4
      %s18 = int_to_ptr.vmem [resolvable:$true] %s17
      %23 = dma.hbm_to_vmem [thread:$0]  %s16, 256, %s18, [#allocation3], 128, 128, 8
    $region5: #{tpu_custom_call.1} parent=1 // pred_fallthru
      _
    // Predicated region
    $region6: #{tpu_custom_call.1} parent=1 // pred_check
      _
    $region7: #{tpu_custom_call.1} parent=1 // pred_check_branch
      %25 = sbr.rel (0) target = $region9
    $region8: #{tpu_custom_call.1} parent=1 // pred_region
      %26 = dma.done [#allocation3], 256
    $region9: #{tpu_custom_call.1} parent=1 // pred_fallthru
      _
    %s27 = sadd.s32 0, 0
    %s28 = smul.u32 2, %s27
    %p29 = scmp.eq.s32.totalorder 0, 0
    // Predicated region
    $region10: #{tpu_custom_call.1} parent=1 // pred_check
      %p30 = pneg %p29
    $region11: #{tpu_custom_call.1} parent=1 // pred_check_branch
      %32 = sbr.rel (%p30) target = $region13
    $region12: #{tpu_custom_call.1} parent=1 // pred_region
      %v33 = vlaneseq
      %vm34 = vcmp.ge.s32.totalorder %v33, 0
      %vm35 = vcmp.lt.s32.totalorder %v33, 256
      %vm36 = vmand %vm34, %vm35
      %37 = vst.msk [vmem:[#allocation5] sm:$0x3] %vm36, 0.0
      %38 = vst.msk [vmem:[#allocation5 + $0x2] sm:$0x3] %vm36, 0.0
    $region13: #{tpu_custom_call.1} parent=1 // pred_fallthru
      _
    %v39 = vld [vmem:[#allocation2] sm:$0xff]
    %v40 = vld [vmem:[#allocation2 + $0x8] sm:$0xff]
    %v43 = vcombine.high %v39, %v39
    %v44 = vcombine.high %v40, %v40
    %vm47 = vcmask 1043456
    %v48 = vsel %vm47, %v39, -inf
    %v49 = vrot.slane %v48, 4
    %v50 = vmax.f32 %v48, %v49
    %v51 = vrot.slane %v50, 2
    %v52 = vmax.f32 %v50, %v51
    %v53 = vrot.slane %v52, 1
    %v54 = vmax.f32 %v52, %v53
    %v55 = vsel %vm47, %v43, -inf
    %v56 = vrot.slane %v55, 4
    %v57 = vmax.f32 %v55, %v56
    %v58 = vrot.slane %v57, 2
    %v59 = vmax.f32 %v57, %v58
    %v60 = vrot.slane %v59, 1
    %v61 = vmax.f32 %v59, %v60
    %v62 = vsel %vm47, %v40, -inf
    %v63 = vrot.slane %v62, 4
    %v64 = vmax.f32 %v62, %v63
    %v65 = vrot.slane %v64, 2
    %v66 = vmax.f32 %v64, %v65
    %v67 = vrot.slane %v66, 1
    %v68 = vmax.f32 %v66, %v67
    %v69 = vsel %vm47, %v44, -inf
    %v70 = vrot.slane %v69, 4
    %v71 = vmax.f32 %v69, %v70
    %v72 = vrot.slane %v71, 2
    %v73 = vmax.f32 %v71, %v72
    %v74 = vrot.slane %v73, 1
    %v75 = vmax.f32 %v73, %v74
    %v80 = vcombine.low %v54, %v61
    %v81 = vcombine.low %v68, %v75
    %v84 = vsub.f32 %v39, %v80
    %v85 = vsub.f32 %v40, %v81
    %v86 = vmul.f32 %v84, 1.442695
    %v87 = vpow.pop %v86
    %v88 = vmul.f32 %v85, 1.442695
    %v89 = vpow.pop %v88
    %v92 = vcombine.high %v87, %v87
    %v93 = vcombine.high %v89, %v89
    %v96 = vsel %vm47, %v87, 0.0
    %v97 = vrot.slane %v96, 4
    %v98 = vadd.f32 %v96, %v97
    %v99 = vrot.slane %v98, 2
    %v100 = vadd.f32 %v98, %v99
    %v101 = vrot.slane %v100, 1
    %v102 = vadd.f32 %v100, %v101
    %v103 = vsel %vm47, %v92, 0.0
    %v104 = vrot.slane %v103, 4
    %v105 = vadd.f32 %v103, %v104
    %v106 = vrot.slane %v105, 2
    %v107 = vadd.f32 %v105, %v106
    %v108 = vrot.slane %v107, 1
    %v109 = vadd.f32 %v107, %v108
    %v110 = vsel %vm47, %v89, 0.0
    %v111 = vrot.slane %v110, 4
    %v112 = vadd.f32 %v110, %v111
    %v113 = vrot.slane %v112, 2
    %v114 = vadd.f32 %v112, %v113
    %v115 = vrot.slane %v114, 1
    %v116 = vadd.f32 %v114, %v115
    %v117 = vsel %vm47, %v93, 0.0
    %v118 = vrot.slane %v117, 4
    %v119 = vadd.f32 %v117, %v118
    %v120 = vrot.slane %v119, 2
    %v121 = vadd.f32 %v119, %v120
    %v122 = vrot.slane %v121, 1
    %v123 = vadd.f32 %v121, %v122
    %v124 = vmul.f32 %v87, %v84
    %v125 = vmul.f32 %v89, %v85
    %v128 = vcombine.high %v124, %v124
    %v129 = vcombine.high %v125, %v125
    %v132 = vsel %vm47, %v124, 0.0
    %v133 = vrot.slane %v132, 4
    %v134 = vadd.f32 %v132, %v133
    %v135 = vrot.slane %v134, 2
    %v136 = vadd.f32 %v134, %v135
    %v137 = vrot.slane %v136, 1
    %v138 = vadd.f32 %v136, %v137
    %v139 = vsel %vm47, %v128, 0.0
    %v140 = vrot.slane %v139, 4
    %v141 = vadd.f32 %v139, %v140
    %v142 = vrot.slane %v141, 2
    %v143 = vadd.f32 %v141, %v142
    %v144 = vrot.slane %v143, 1
    %v145 = vadd.f32 %v143, %v144
    %v146 = vsel %vm47, %v125, 0.0
    %v147 = vrot.slane %v146, 4
    %v148 = vadd.f32 %v146, %v147
    %v149 = vrot.slane %v148, 2
    %v150 = vadd.f32 %v148, %v149
    %v151 = vrot.slane %v150, 1
    %v152 = vadd.f32 %v150, %v151
    %v153 = vsel %vm47, %v129, 0.0
    %v154 = vrot.slane %v153, 4
    %v155 = vadd.f32 %v153, %v154
    %v156 = vrot.slane %v155, 2
    %v157 = vadd.f32 %v155, %v156
    %v158 = vrot.slane %v157, 1
    %v159 = vadd.f32 %v157, %v158
    %v160 = vrcp.pop %v102
    %v161 = vmul.f32 %v138, %v160
    %v162 = vrcp.pop %v109
    %v163 = vmul.f32 %v145, %v162
    %v164 = vrcp.pop %v116
    %v165 = vmul.f32 %v152, %v164
    %v166 = vrcp.pop %v123
    %v167 = vmul.f32 %v159, %v166
    %v168 = vlog2.pop %v102
    %v169 = vmul.f32 %v168, 0.6931472
    %v170 = vlog2.pop %v109
    %v171 = vmul.f32 %v170, 0.6931472
    %v172 = vlog2.pop %v116
    %v173 = vmul.f32 %v172, 0.6931472
    %v174 = vlog2.pop %v123
    %v175 = vmul.f32 %v174, 0.6931472
    %v176 = vsub.f32 %v161, %v169
    %v177 = vsub.f32 %v163, %v171
    %v178 = vsub.f32 %v165, %v173
    %v179 = vsub.f32 %v167, %v175
    %v180 = vld [vmem:[#allocation5] sm:$0x3]
    %v181 = vld [vmem:[#allocation5 + $0x2] sm:$0x3]
    %v186 = vcombine.low %v176, %v177
    %v188 = vunpack.c.l.s4 1966171168
    %v189 = vunpack.c.0.s8 %v188
    %v190 = vlaneseq
    %v191 = vshrl.u32 %v190, 7
    %v192 = vsub.s32 %v189, %v191
    %v193 = vrot.slane %v186, %v192
    %v195 = vunpack.c.l.s4 1966171168
    %v196 = vunpack.c.0.s8 %v195
    %v197 = vlaneseq
    %v198 = vshrl.u32 %v197, 7
    %v199 = vsub.s32 %v196, %v198
    %v200 = vrot.slane %v193, %v199
    %v201 = vcombine.low %v178, %v179
    %v203 = vunpack.c.l.s4 1966171168
    %v204 = vunpack.c.0.s8 %v203
    %v205 = vlaneseq
    %v206 = vshrl.u32 %v205, 7
    %v207 = vsub.s32 %v204, %v206
    %v208 = vrot.slane %v201, %v207
    %v210 = vunpack.c.l.s4 1966171168
    %v211 = vunpack.c.0.s8 %v210
    %v212 = vlaneseq
    %v213 = vshrl.u32 %v212, 7
    %v214 = vsub.s32 %v211, %v213
    %v215 = vrot.slane %v208, %v214
    %v218 = vadd.f32 %v180, %v200
    %v219 = vadd.f32 %v181, %v215
    %v220 = vlaneseq
    %vm221 = vcmp.ge.s32.totalorder %v220, 0
    %vm222 = vcmp.lt.s32.totalorder %v220, 256
    %vm223 = vmand %vm221, %vm222
    %224 = vst.msk [vmem:[#allocation5] sm:$0x3] %vm223, %v218
    %225 = vst.msk [vmem:[#allocation5 + $0x2] sm:$0x3] %vm223, %v219
    // Predicated region
    $region14: #{tpu_custom_call.1} parent=1 // pred_check
      _
    $region15: #{tpu_custom_call.1} parent=1 // pred_check_branch
      %227 = sbr.rel (0) target = $region17
    $region16: #{tpu_custom_call.1} parent=1 // pred_region
      %s229 = ssub.s32 64, 64
      %230 = vsyncadd [#allocation4], %s229
      %s231 = sshll.u32 [#allocation5], 4
      %s232 = int_to_ptr.vmem [resolvable:$true] %s231
      %237 = dma.vmem_to_hbm [thread:$0]  %s232, 64, %s1, [#allocation4], 32, 32, 2
    $region17: #{tpu_custom_call.1} parent=1 // pred_fallthru
      _
    // Predicated region
    $region18: #{tpu_custom_call.1} parent=1 // pred_check
      _
    $region19: #{tpu_custom_call.1} parent=1 // pred_check_branch
      %239 = sbr.rel (0) target = $region21
    $region20: #{tpu_custom_call.1} parent=1 // pred_region
      %240 = dma.done [#allocation4], 64
    $region21: #{tpu_custom_call.1} parent=1 // pred_fallthru
      _
    %241 = vsyncpa [#allocation3], 1
    %242 = vsyncpa [#allocation4], 1

</llo_original>
